<compile_context>
chip_gen: v6e
topology: v6e:2x2x1
jax: 0.10.0
libtpu: 0.0.40
codegen_flags: <defaults>
</compile_context>

<pallas_src>
import functools

import jax
import jax.numpy as jnp
from jax.experimental import pallas as pl
from jax.experimental.pallas import tpu as pltpu

_LOG_EPS = 1e-8


def _make_kernel(batch, tile_rows, needs_mask, assume_binary_targets):
    def kernel(inp_ref, tgt_ref, out_ref, acc_ref):
        step = pl.program_id(0)

        @pl.when(step == 0)
        def _init():
            acc_ref[...] = jnp.zeros_like(acc_ref)

        x = inp_ref[...].astype(jnp.float32)          # (tile_rows, C)
        t = tgt_ref[...].astype(jnp.float32)          # (tile_rows, C)

        if assume_binary_targets:
            # One transcendental per element (EUP is the scarce unit, esp. v7x).
            # Exactly equal to the two-log form when t is in {0, 1}.
            ce = -jnp.log(t * x + (1.0 - t) * (1.0 - x) + _LOG_EPS)
        else:
            # Exact module semantics (valid for soft labels too): two logs/elem.
            ce = -(t * jnp.log(x + _LOG_EPS)
                   + (1.0 - t) * jnp.log(1.0 - x + _LOG_EPS))

        if needs_mask:
            # Last tile may read past the real batch; zero those rows.
            row = step * tile_rows + jax.lax.broadcasted_iota(jnp.int32, ce.shape, 0)
            ce = jnp.where(row < batch, ce, 0.0)

        # Single full-tile reduction per step (no per-sample (B,1) temporary).
        acc_ref[...] += jnp.sum(ce)

        @pl.when(step == pl.num_programs(0) - 1)
        def _finalize():
            out_ref[...] = acc_ref[...] / jnp.float32(batch)

    return kernel


@functools.partial(jax.jit, static_argnames=("assume_binary_targets", "tile_rows"))
def cross_entropy(inputs, targets, *, assume_binary_targets=False, tile_rows=None):
    """Pallas implementation of CrossEntropy.forward.

    inputs, targets: (batch, n_labels) arrays (probabilities / labels).
    Returns a scalar float32 loss = mean_batch( sum_classes( BCE ) ).
    """
    assert inputs.shape == targets.shape and inputs.ndim == 2
    B, C = inputs.shape

    itemsize = max(jnp.dtype(inputs.dtype).itemsize, jnp.dtype(targets.dtype).itemsize)
    bytes_per_row = C * itemsize

    if tile_rows is None:
        # ~4 MiB per input buffer: safely inside v7x's 64 MiB VMEM with
        # 2 inputs x 2 pipeline buffers, and large enough to sit on the
        # HBM-roofline plateau on v5e/v6e.
        target_tile_bytes = 4 * 1024 * 1024
        if B * bytes_per_row <= target_tile_bytes:
            tb = B                                            # full extent (rule-exempt)
        else:
            tb = max(8, (target_tile_bytes // bytes_per_row) // 8 * 8)
    else:
        tb = int(tile_rows)
        if tb < B:
            assert tb % 8 == 0, "tile_rows must be a multiple of 8 when < batch"
        else:
            tb = B

    num_tiles = pl.cdiv(B, tb)
    needs_mask = (B % tb) != 0

    tile_bytes = tb * bytes_per_row
    # 2 inputs x 2 pipeline buffers per input + small headroom for scratch/output.
    vmem_limit = int(min(64 << 20, max(16 << 20, 4 * tile_bytes + (2 << 20))))

    kernel = _make_kernel(B, tb, needs_mask, assume_binary_targets)

    out = pl.pallas_call(
        kernel,
        out_shape=jax.ShapeDtypeStruct((1, 1), jnp.float32),
        grid=(num_tiles,),
        in_specs=[
            pl.BlockSpec((tb, C), lambda i: (i, 0)),
            pl.BlockSpec((tb, C), lambda i: (i, 0)),
        ],
        out_specs=pl.BlockSpec((1, 1), lambda i: (0, 0)),
        scratch_shapes=[pltpu.VMEM((1, 1), jnp.float32)],
        compiler_params=pltpu.CompilerParams(
            dimension_semantics=("arbitrary",),
            vmem_limit_bytes=vmem_limit,
        ),
    )(inputs, targets)
    return out[0, 0]


def _reference(inputs, targets):
    ce = -(targets * jnp.log(inputs + _LOG_EPS)
           + (1.0 - targets) * jnp.log(1.0 - inputs + _LOG_EPS))
    return jnp.mean(jnp.sum(ce, axis=1))


if __name__ == "__main__":
    key = jax.random.PRNGKey(0)
    k1, k2, k3, k4 = jax.random.split(key, 4)

    # --- small case: single tile -------------------------------------------
    batch, n_labels = 8, 16
    inputs = jax.nn.sigmoid(jax.random.normal(k1, (batch, n_labels), jnp.float32))
    targets = jax.random.bernoulli(k2, 0.5, (batch, n_labels)).astype(jnp.float32)

    loss = cross_entropy(inputs, targets)
    jax.block_until_ready(loss)
    ref = _reference(inputs, targets)
    assert jnp.allclose(loss, ref, rtol=1e-5, atol=1e-5), (loss, ref)

    # one-log path (targets here are hard 0/1, so it is exactly equivalent)
    loss_bin = cross_entropy(inputs, targets, assume_binary_targets=True)
    jax.block_until_ready(loss_bin)
    assert jnp.allclose(loss_bin, ref, rtol=1e-5, atol=1e-5), (loss_bin, ref)

    # --- multi-tile + partial-last-tile masking path -------------------------
    batch2, n_labels2 = 20, 16          # 3 tiles of 8 rows, last tile masked
    inputs2 = jax.nn.sigmoid(jax.random.normal(k3, (batch2, n_labels2), jnp.float32))
    targets2 = jax.random.bernoulli(k4, 0.5, (batch2, n_labels2)).astype(jnp.float32)

    loss2 = cross_entropy(inputs2, targets2, tile_rows=8)
    jax.block_until_ready(loss2)
    ref2 = _reference(inputs2, targets2)
    assert jnp.allclose(loss2, ref2, rtol=1e-5, atol=1e-5), (loss2, ref2)

    print("KERNEL_OK")
</pallas_src>

<mosaic_0001>
module attributes {stable_mosaic.version = 11 : i64} {
  func.func @kernel(%arg0: i32, %arg1: memref<8x16xf32, #tpu.memory_space<vmem>>, %arg2: memref<8x16xf32, #tpu.memory_space<vmem>>, %arg3: memref<1x1xf32, #tpu.memory_space<vmem>>, %arg4: memref<1x1xf32, #tpu.memory_space<vmem>>) attributes {dimension_semantics = [#tpu.dimension_semantics<arbitrary>], iteration_bounds = array<i64: 1>, scalar_prefetch = 0 : i64, scratch_operands = 1 : i64, tpu.core_type = #tpu.core_type<tc>, window_params = [{transform_indices = @transform_0, window_bounds = array<i64: 8, 16>}, {transform_indices = @transform_1, window_bounds = array<i64: 8, 16>}, {pipeline_mode = #tpu.pipeline_mode<synchronous>, transform_indices = @transform_2, window_bounds = array<i64: 1, 1>}]} {
    %c0_i32 = arith.constant 0 : i32
    %0 = arith.cmpi eq, %arg0, %c0_i32 : i32
    %1 = arith.extui %0 : i1 to i32
    %c0_i32_0 = arith.constant 0 : i32
    %2 = arith.cmpi ne, %1, %c0_i32_0 : i32
    scf.if %2 {
      %cst_15 = arith.constant 0.000000e+00 : f32
      %31 = vector.broadcast %cst_15 : f32 to vector<1x1xf32>
      %c0_16 = arith.constant 0 : index
      %c0_17 = arith.constant 0 : index
      %32 = vector.load %arg4[%c0_16, %c0_17] : memref<1x1xf32, #tpu.memory_space<vmem>>, vector<1x1xf32>
      tpu.vector_store %arg4[%c0_16, %c0_17], %31 {strides = array<i32>} : memref<1x1xf32, #tpu.memory_space<vmem>>, vector<1x1xf32>,
    } else {
    }
    %c0 = arith.constant 0 : index
    %c0_1 = arith.constant 0 : index
    %3 = vector.load %arg1[%c0, %c0_1] : memref<8x16xf32, #tpu.memory_space<vmem>>, vector<8x16xf32>
    %c0_2 = arith.constant 0 : index
    %c0_3 = arith.constant 0 : index
    %4 = vector.load %arg2[%c0_2, %c0_3] : memref<8x16xf32, #tpu.memory_space<vmem>>, vector<8x16xf32>
    %cst = arith.constant 9.99999993E-9 : f32
    %5 = vector.broadcast %cst : f32 to vector<8x16xf32>
    %6 = arith.addf %3, %5 : vector<8x16xf32>
    %7 = math.log %6 : vector<8x16xf32>
    %8 = arith.mulf %4, %7 : vector<8x16xf32>
    %cst_4 = arith.constant 1.000000e+00 : f32
    %9 = vector.broadcast %cst_4 : f32 to vector<8x16xf32>
    %10 = arith.subf %9, %4 : vector<8x16xf32>
    %cst_5 = arith.constant 1.000000e+00 : f32
    %11 = vector.broadcast %cst_5 : f32 to vector<8x16xf32>
    %12 = arith.subf %11, %3 : vector<8x16xf32>
    %cst_6 = arith.constant 9.99999993E-9 : f32
    %13 = vector.broadcast %cst_6 : f32 to vector<8x16xf32>
    %14 = arith.addf %12, %13 : vector<8x16xf32>
    %15 = math.log %14 : vector<8x16xf32>
    %16 = arith.mulf %10, %15 : vector<8x16xf32>
    %17 = arith.addf %8, %16 : vector<8x16xf32>
    %cst_7 = arith.constant 0.000000e+00 : f32
    %18 = vector.broadcast %cst_7 : f32 to vector<8x16xf32>
    %19 = arith.subf %18, %17 : vector<8x16xf32>
    %c0_8 = arith.constant 0 : index
    %c0_9 = arith.constant 0 : index
    %20 = vector.load %arg4[%c0_8, %c0_9] : memref<1x1xf32, #tpu.memory_space<vmem>>, vector<1x1xf32>
    %21 = vector.shape_cast %19 : vector<8x16xf32> to vector<1x8x16xf32>
    %cst_10 = arith.constant dense<0.000000e+00> : vector<1xf32>
    %22 = vector.multi_reduction <add>, %21, %cst_10 [1, 2] : vector<1x8x16xf32> to vector<1xf32>
    %23 = vector.shape_cast %22 : vector<1xf32> to vector<1x1x1xf32>
    %24 = vector.extract %23[0, 0, 0] : f32 from vector<1x1x1xf32>
    %25 = vector.broadcast %24 : f32 to vector<1x1xf32>
    %26 = arith.addf %20, %25 : vector<1x1xf32>
    %c0_11 = arith.constant 0 : index
    %c0_12 = arith.constant 0 : index
    %27 = vector.load %arg4[%c0_11, %c0_12] : memref<1x1xf32, #tpu.memory_space<vmem>>, vector<1x1xf32>
    tpu.vector_store %arg4[%c0_11, %c0_12], %26 {strides = array<i32>} : memref<1x1xf32, #tpu.memory_space<vmem>>, vector<1x1xf32>,
    %c0_i32_13 = arith.constant 0 : i32
    %28 = arith.cmpi eq, %arg0, %c0_i32_13 : i32
    %29 = arith.extui %28 : i1 to i32
    %c0_i32_14 = arith.constant 0 : i32
    %30 = arith.cmpi ne, %29, %c0_i32_14 : i32
    scf.if %30 {
      %c0_15 = arith.constant 0 : index
      %c0_16 = arith.constant 0 : index
      %31 = vector.load %arg4[%c0_15, %c0_16] : memref<1x1xf32, #tpu.memory_space<vmem>>, vector<1x1xf32>
      %cst_17 = arith.constant 8.000000e+00 : f32
      %32 = vector.broadcast %cst_17 : f32 to vector<1x1xf32>
      %33 = arith.divf %31, %32 : vector<1x1xf32>
      %c0_18 = arith.constant 0 : index
      %c0_19 = arith.constant 0 : index
      %34 = vector.load %arg3[%c0_18, %c0_19] : memref<1x1xf32, #tpu.memory_space<vmem>>, vector<1x1xf32>
      tpu.vector_store %arg3[%c0_18, %c0_19], %33 {strides = array<i32>} : memref<1x1xf32, #tpu.memory_space<vmem>>, vector<1x1xf32>,
    } else {
    }
    return
  }
  func.func @transform_0(%arg0: i32) -> (i32, i32) {
    %c0_i32 = arith.constant 0 : i32
    %c0_i32_0 = arith.constant 0 : i32
    return %arg0, %c0_i32 : i32, i32
  }
  func.func @transform_1(%arg0: i32) -> (i32, i32) {
    %c0_i32 = arith.constant 0 : i32
    %c0_i32_0 = arith.constant 0 : i32
    return %arg0, %c0_i32 : i32, i32
  }
  func.func @transform_2(%arg0: i32) -> (i32, i32) {
    %c0_i32 = arith.constant 0 : i32
    %c0_i32_0 = arith.constant 0 : i32
    %c0_i32_1 = arith.constant 0 : i32
    return %c0_i32, %c0_i32_0 : i32, i32
  }
}

</mosaic_0001>

<llo_original>
// kernel: cross_entropy.1
$region0: #{cross_entropy.1}
  #allocation0 [shape = 'u32[]', space=smem, size = 0x4, offset = 0x4, fixed_abs, tag = 'smem constant byte address 0x4 - core index']
  #allocation1 [shape = 'u32[144,128]{1,0:T(1,128)}', space=vmem, size = 0x12000, scoped, tag = 'internal scratch']
  #allocation2 [shape = 'f32[1,1]{1,0:T(1,128)}', space=vmem, size = 0x200, scoped, tag = 'scratch operand']
  %s0 = inlined_call_operand.hbm [shape: f32[8,16], index: 0, kind: input, shape index: {}]
  %s1 = inlined_call_operand.hbm [shape: f32[8,16], index: 1, kind: input, shape index: {}]
  %s2 = inlined_call_operand.hbm [shape: f32[1,1], index: 2, kind: output, shape index: {}]
  %s3 = sld [smem:[#allocation0]]
  $region34: #{cross_entropy.1} parent=0
    _
  %s5 = ssub.s32 1, %s3
  %s6 = scalar_select 0, %s5, %s3
  $region1: #{cross_entropy.1} parent=0
    #allocation3 [shape = 'u8[4096]{0}', space=vmem, size = 0x1000, scoped, tag = 'input window, operand 0, single buffered']
    #allocation4 [shape = 's32[1]{0}', space=sflag, size = 0x4, scoped, tag = 'scoped memory for cross_entropy.1']
    #allocation5 [shape = 's32[1]{0}', space=sflag, size = 0x4, scoped, tag = 'scoped memory for cross_entropy.1']
    #allocation6 [shape = 'u8[4096]{0}', space=vmem, size = 0x1000, scoped, tag = 'input window, operand 1, single buffered']
    #allocation7 [shape = 's32[1]{0}', space=sflag, size = 0x4, scoped, tag = 'scoped memory for cross_entropy.1']
    #allocation8 [shape = 'u8[512]{0}', space=vmem, size = 0x400, scoped, tag = 'output window, operand 0, single buffered']
    %7 = vsyncpa [#allocation4], 0
    %8 = vsyncpa [#allocation7], 0
    %9 = vsyncpa [#allocation5], 0
    // Predicated region
    $region2: #{cross_entropy.1} parent=1 // pred_check
      _
    $region3: #{cross_entropy.1} parent=1 // pred_check_branch
      %11 = sbr.rel (0) target = $region5
    $region4: #{cross_entropy.1} parent=1 // pred_region
      %s13 = ssub.s32 128, 128
      %14 = vsyncadd [#allocation4], %s13
      %s16 = sshll.u32 [#allocation3], 4
      %s17 = int_to_ptr.vmem [resolvable:$true] %s16
      %19 = dma.hbm_to_vmem [thread:$0]  %s0, 128, %s17, [#allocation4]
    $region5: #{cross_entropy.1} parent=1 // pred_fallthru
      _
    // Predicated region
    $region6: #{cross_entropy.1} parent=1 // pred_check
      _
    $region7: #{cross_entropy.1} parent=1 // pred_check_branch
      %21 = sbr.rel (0) target = $region9
    $region8: #{cross_entropy.1} parent=1 // pred_region
      %s23 = ssub.s32 128, 128
      %24 = vsyncadd [#allocation7], %s23
      %s26 = sshll.u32 [#allocation6], 4
      %s27 = int_to_ptr.vmem [resolvable:$true] %s26
      %29 = dma.hbm_to_vmem [thread:$0]  %s1, 128, %s27, [#allocation7]
    $region9: #{cross_entropy.1} parent=1 // pred_fallthru
      _
    // Predicated region
    $region10: #{cross_entropy.1} parent=1 // pred_check
      _
    $region11: #{cross_entropy.1} parent=1 // pred_check_branch
      %31 = sbr.rel (0) target = $region13
    $region12: #{cross_entropy.1} parent=1 // pred_region
      %32 = dma.done [#allocation4], 128
    $region13: #{cross_entropy.1} parent=1 // pred_fallthru
      _
    // Predicated region
    $region14: #{cross_entropy.1} parent=1 // pred_check
      _
    $region15: #{cross_entropy.1} parent=1 // pred_check_branch
      %34 = sbr.rel (0) target = $region17
    $region16: #{cross_entropy.1} parent=1 // pred_region
      %35 = dma.done [#allocation7], 128
    $region17: #{cross_entropy.1} parent=1 // pred_fallthru
      _
    %p36 = scmp.eq.s32.totalorder 0, 0
    // Predicated region
    $region18: #{cross_entropy.1} parent=1 // pred_check
      %p37 = pneg %p36
    $region19: #{cross_entropy.1} parent=1 // pred_check_branch
      %39 = sbr.rel (%p37) target = $region21
    $region20: #{cross_entropy.1} parent=1 // pred_region
      %vm40 = vcmask 0
      %41 = vst.msk [vmem:[#allocation2] sm:$0x1] %vm40, 0.0
    $region21: #{cross_entropy.1} parent=1 // pred_fallthru
      _
    %v42 = vld [vmem:[#allocation3] sm:$0xff]
    %v43 = vld [vmem:[#allocation6] sm:$0xff]
    %v44 = vadd.f32 %v42, 1e-08
    %v45 = vlog2.pop %v44
    %v46 = vmul.f32 %v45, 0.6931472
    %v47 = vmul.f32 %v43, %v46
    %v48 = vsub.f32 1.0, %v43
    %v49 = vsub.f32 1.0, %v42
    %v50 = vadd.f32 %v49, 1e-08
    %v51 = vlog2.pop %v50
    %v52 = vmul.f32 %v51, 0.6931472
    %v53 = vmul.f32 %v48, %v52
    %v54 = vadd.f32 %v47, %v53
    %v55 = vsub.f32 0.0, %v54
    %v56 = vld [vmem:[#allocation2] sm:$0x1]
    %vm57 = vcmask 130048
    %v58 = vsel %vm57, %v55, 0.0
    %59 = vadd.xlane.f32.xlu0 %v58
    %v60 = vpop.xlane.xlu0 %59
    %v61 = vrot.slane %v60, 4
    %v62 = vadd.f32 %v60, %v61
    %v63 = vrot.slane %v62, 2
    %v64 = vadd.f32 %v62, %v63
    %v65 = vrot.slane %v64, 1
    %v66 = vadd.f32 %v64, %v65
    %s67 = vtos %v66
    %v68 = vstv %s67
    %v69 = vadd.f32 %v56, %v68
    %vm70 = vcmask 0
    %71 = vst.msk [vmem:[#allocation2] sm:$0x1] %vm70, %v69
    // Predicated region
    $region22: #{cross_entropy.1} parent=1 // pred_check
      %p72 = pneg %p36
    $region23: #{cross_entropy.1} parent=1 // pred_check_branch
      %74 = sbr.rel (%p72) target = $region25
    $region24: #{cross_entropy.1} parent=1 // pred_region
      %v75 = vld [vmem:[#allocation2] sm:$0x1]
      %v76 = vrcp.pop 8.0
      %v77 = vmul.f32 %v75, %v76
      %78 = vst.msk [vmem:[#allocation8] sm:$0x1] %vm70, %v77
    $region25: #{cross_entropy.1} parent=1 // pred_fallthru
      _
    // Predicated region
    $region26: #{cross_entropy.1} parent=1 // pred_check
      _
    $region27: #{cross_entropy.1} parent=1 // pred_check_branch
      %80 = sbr.rel (0) target = $region29
    $region28: #{cross_entropy.1} parent=1 // pred_region
      %s82 = ssub.s32 16, 16
      %83 = vsyncadd [#allocation5], %s82
      %s85 = sshll.u32 [#allocation8], 4
      %s86 = int_to_ptr.vmem [resolvable:$true] %s85
      %88 = dma.vmem_to_hbm [thread:$0]  %s86, 16, %s2, [#allocation5]
    $region29: #{cross_entropy.1} parent=1 // pred_fallthru
      _
    // Predicated region
    $region30: #{cross_entropy.1} parent=1 // pred_check
      _
    $region31: #{cross_entropy.1} parent=1 // pred_check_branch
      %90 = sbr.rel (0) target = $region33
    $region32: #{cross_entropy.1} parent=1 // pred_region
      %91 = dma.done [#allocation5], 16
    $region33: #{cross_entropy.1} parent=1 // pred_fallthru
      _
    %92 = vsyncpa [#allocation4], 1
    %93 = vsyncpa [#allocation7], 1
    %94 = vsyncpa [#allocation5], 1

</llo_original>
